<compile_context>
chip_gen: v7x
topology: tpu7x:2x2x1
jax: 0.10.0
libtpu: 0.0.40
codegen_flags: <defaults>
</compile_context>

<pallas_src>
import jax
import jax.numpy as jnp
from jax.experimental import pallas as pl
from jax.experimental.pallas import tpu as pltpu


def _round_up(x: int, m: int) -> int:
    return (x + m - 1) // m * m


# ---------------------------------------------------------------------------
# Resident (constant index_map) BlockSpecs: single-buffer when supported.
# ---------------------------------------------------------------------------
def _probe_weight_buffers() -> int:
    try:
        pl.BlockSpec((8, 128), lambda i: (0, 0), pipeline_mode=pl.Buffered(1))
        return 1
    except Exception:  # older jax: no pipeline_mode / pl.Buffered
        return 2


_WEIGHT_BUFFERS = _probe_weight_buffers()


def _resident_spec(block_shape):
    """BlockSpec for an input whose block never changes across the grid."""
    index_map = lambda i: (0,) * len(block_shape)
    if _WEIGHT_BUFFERS == 1:
        return pl.BlockSpec(block_shape, index_map,
                            pipeline_mode=pl.Buffered(1))
    return pl.BlockSpec(block_shape, index_map)


def _vmem_capacity_bytes() -> int:
    """Physical VMEM per TensorCore (64 MiB on v7x, 128 MiB on v5e/v6e)."""
    try:
        return int(pltpu.get_tpu_info().vmem_capacity_bytes)
    except Exception:
        pass
    try:
        kind = jax.devices()[0].device_kind.lower()
    except Exception:
        kind = ""
    if "v5" in kind or "v6" in kind:
        return 128 << 20
    return 64 << 20  # conservative default (v7x-sized)


def _choose_batch_tile(B, F, Hp, Op, x_bytes, out_bytes, resident_bytes,
                       vmem_cap):
    b8 = max(8, _round_up(B, 8))
    # Generation-aware ceiling: 128 MiB chips (v5e/v6e) take 1024-row tiles;
    # 64 MiB (v7x) caps at 512, or 256 once (tb, Hp) temporaries dominate.
    if vmem_cap >= (96 << 20):
        max_tb = 1024
    else:
        max_tb = 256 if Hp >= 2048 else 512
    max_tb = min(max_tb, b8)
    # Keep >= 2 grid steps when the batch allows it, so the "parallel" axis
    # can split across TensorCores (v7x megacore) and x/out DMAs pipeline.
    if B >= 16:
        max_tb = min(max_tb, _round_up(pl.cdiv(b8, 2), 8))
    # Fit double-buffered x/out tiles + f32/bf16 hidden temporaries next to
    # the resident weights inside a safe slice of VMEM.
    budget = min(vmem_cap - (8 << 20), 100 << 20) - resident_bytes - (4 << 20)
    per_row = 2 * F * x_bytes + 2 * Op * out_bytes + Hp * 6
    fit = (budget // per_row) // 8 * 8 if budget > per_row * 8 else 8
    return int(max(8, min(max_tb, fit)))


def mlp_kernel(x_ref, w1_ref, b1_ref, w2_ref, b2_ref, o_ref):
    # Layer 1: bf16 MXU matmul (in-kernel cast if x shipped as f32), f32 acc.
    x = x_ref[...].astype(jnp.bfloat16)
    h = jnp.dot(x, w1_ref[...], preferred_element_type=jnp.float32)
    h = jnp.tanh(h + b1_ref[...])                        # (tb, Hp) + (1, Hp)
    # Layer 2: downcast activations for the MXU, accumulate in f32.
    o = jnp.dot(h.astype(jnp.bfloat16), w2_ref[...],
                preferred_element_type=jnp.float32)
    o_ref[...] = (o + b2_ref[...]).astype(o_ref.dtype)   # (tb, Op) + (1, Op)


def _pad2(a, rows, cols, dtype):
    a = a.astype(dtype)
    r, c = a.shape
    if r == rows and c == cols:
        return a
    return jnp.zeros((rows, cols), dtype).at[:r, :c].set(a)


def prepare_params(w1, b1, w2, b2):
    """Pad / cast the parameters ONCE (hoisted out of the per-call path).

    w1: (F, H), b1: (H,) or (1, H), w2: (H, O), b2: (O,) or (1, O).
    Returns (w1p, b1p, w2p, b2p): lane dims padded to 128-multiples, weights
    in bf16 (MXU-native), biases in f32.
    """
    F, H = w1.shape
    O = w2.shape[1]
    Hp, Op = _round_up(H, 128), _round_up(O, 128)
    w1p = _pad2(w1, F, Hp, jnp.bfloat16)
    w2p = _pad2(w2, Hp, Op, jnp.bfloat16)
    b1p = _pad2(jnp.asarray(b1).reshape(1, H), 1, Hp, jnp.float32)
    b2p = _pad2(jnp.asarray(b2).reshape(1, O), 1, Op, jnp.float32)
    return w1p, b1p, w2p, b2p


def mlp_forward(x, w1p, b1p, w2p, b2p, *, out_features, batch_tile=None):
    """tanh(x @ W1 + b1) @ W2 + b2 with pre-padded params (prepare_params)."""
    B, F = x.shape
    assert w1p.shape[0] == F, "w1p must be (F, Hp); run prepare_params first"
    Hp = w1p.shape[1]
    Op = w2p.shape[1]
    O = out_features
    out_dtype = x.dtype

    vmem_cap = _vmem_capacity_bytes()
    resident_bytes = _WEIGHT_BUFFERS * (F * Hp * 2 + Hp * 4
                                        + Hp * Op * 2 + Op * 4)

    # Wire dtype for x: in the small-hidden (mem-bound) regime halving x's
    # HBM bytes beats skipping the convert pass (v5e crosses over earliest);
    # in the MXU-bound regime ship x as-is and cast on the VPU in-kernel.
    wire_dtype = jnp.bfloat16 if Hp <= 256 else x.dtype
    x_bytes = jnp.dtype(wire_dtype).itemsize
    out_bytes = jnp.dtype(out_dtype).itemsize

    if batch_tile is None:
        tb = _choose_batch_tile(B, F, Hp, Op, x_bytes, out_bytes,
                                resident_bytes, vmem_cap)
    else:
        tb = max(8, _round_up(batch_tile, 8))
    Bp = _round_up(B, tb)

    # Batch-pad (sublane axis) only when needed; the feature axis stays
    # unpadded (full-extent last dim is exempt from the 128 rule).
    xw = x.astype(wire_dtype)
    if Bp != B:
        xw = jnp.zeros((Bp, F), wire_dtype).at[:B].set(xw)

    grid = (Bp // tb,)

    # VMEM budget: single-buffered residents + double-buffered x/out tiles +
    # (tb, Hp) hidden temporaries (f32 h + bf16 copy fed to the second dot).
    vmem_need = (resident_bytes
                 + 2 * tb * F * x_bytes
                 + 2 * tb * Op * out_bytes
                 + tb * Hp * (4 + 2))
    cap = min(100 << 20, vmem_cap - (8 << 20))       # never above physical VMEM
    vmem_limit = int(min(max(vmem_need + (4 << 20), 32 << 20), cap))

    flops = 2 * Bp * (F * Hp + Hp * Op)
    bytes_accessed = (Bp * F * x_bytes + F * Hp * 2 + Hp * 4
                      + Hp * Op * 2 + Op * 4 + Bp * Op * out_bytes)

    out_padded = pl.pallas_call(
        mlp_kernel,
        out_shape=jax.ShapeDtypeStruct((Bp, Op), out_dtype),
        grid=grid,
        in_specs=[
            pl.BlockSpec((tb, F), lambda i: (i, 0)),   # x tile over batch
            _resident_spec((F, Hp)),                   # W1 (single-buffered)
            _resident_spec((1, Hp)),                   # b1
            _resident_spec((Hp, Op)),                  # W2
            _resident_spec((1, Op)),                   # b2
        ],
        out_specs=pl.BlockSpec((tb, Op), lambda i: (i, 0)),
        compiler_params=pltpu.CompilerParams(
            dimension_semantics=("parallel",),
            vmem_limit_bytes=vmem_limit,
        ),
        cost_estimate=pl.CostEstimate(
            flops=flops, transcendentals=Bp * Hp,
            bytes_accessed=bytes_accessed),
    )(xw, w1p, b1p, w2p, b2p)

    # Slice away batch / output-lane padding (already in the caller's dtype).
    return out_padded[:B, :O]


def init_params(key, input_features, hidden_features, output_features,
                dtype=jnp.float32):
    # Mimics nn.Linear's uniform(-1/sqrt(fan_in), 1/sqrt(fan_in)) init.
    k1, k2, k3, k4 = jax.random.split(key, 4)
    lim1 = 1.0 / jnp.sqrt(jnp.asarray(input_features, dtype))
    lim2 = 1.0 / jnp.sqrt(jnp.asarray(hidden_features, dtype))
    w1 = jax.random.uniform(k1, (input_features, hidden_features), dtype,
                            minval=-lim1, maxval=lim1)
    b1 = jax.random.uniform(k2, (1, hidden_features), dtype,
                            minval=-lim1, maxval=lim1)
    w2 = jax.random.uniform(k3, (hidden_features, output_features), dtype,
                            minval=-lim2, maxval=lim2)
    b2 = jax.random.uniform(k4, (1, output_features), dtype,
                            minval=-lim2, maxval=lim2)
    return w1, b1, w2, b2


if __name__ == "__main__":
    # Net(input_features=32, hidden_features=64, output_features=16), batch=8.
    # NOTE: at this tiny size the call is overhead-bound by construction; the
    # kernel is shaped for realistic (batched / wide) workloads.
    B, F, H, O = 8, 32, 64, 16
    key = jax.random.PRNGKey(0)
    kx, kp = jax.random.split(key)
    x = jax.random.normal(kx, (B, F), jnp.float32)
    w1, b1, w2, b2 = init_params(kp, F, H, O)

    # Param padding / bf16 cast happens once, outside the per-call path.
    prepped = prepare_params(w1, b1, w2, b2)

    fwd = jax.jit(mlp_forward, static_argnames=("out_features",))
    out = fwd(x, *prepped, out_features=O)
    out = jax.block_until_ready(out)

    # Pure-JAX f32 reference; bf16 MXU inputs with f32 accumulation -> looser tol.
    ref = jnp.tanh(x @ w1 + b1) @ w2 + b2
    assert out.shape == (B, O)
    assert out.dtype == x.dtype
    assert bool(jnp.all(jnp.isfinite(out)))
    assert jnp.allclose(out, ref, atol=5e-2, rtol=5e-2), (
        f"max abs diff = {float(jnp.max(jnp.abs(out - ref)))}")
    print("KERNEL_OK")
</pallas_src>

<mosaic_0001>
module attributes {stable_mosaic.version = 11 : i64} {
  func.func @mlp_kernel(%arg0: i32, %arg1: memref<8x32xbf16, #tpu.memory_space<vmem>>, %arg2: memref<32x128xbf16, #tpu.memory_space<vmem>>, %arg3: memref<1x128xf32, #tpu.memory_space<vmem>>, %arg4: memref<128x128xbf16, #tpu.memory_space<vmem>>, %arg5: memref<1x128xf32, #tpu.memory_space<vmem>>, %arg6: memref<8x128xf32, #tpu.memory_space<vmem>>) attributes {dimension_semantics = [#tpu.dimension_semantics<parallel>], iteration_bounds = array<i64: 1>, scalar_prefetch = 0 : i64, scratch_operands = 0 : i64, tpu.core_type = #tpu.core_type<tc>, window_params = [{transform_indices = @transform_0, window_bounds = array<i64: 8, 32>}, {pipeline_mode = #tpu.pipeline_mode<synchronous>, transform_indices = @transform_1, window_bounds = array<i64: 32, 128>}, {pipeline_mode = #tpu.pipeline_mode<synchronous>, transform_indices = @transform_2, window_bounds = array<i64: 1, 128>}, {pipeline_mode = #tpu.pipeline_mode<synchronous>, transform_indices = @transform_3, window_bounds = array<i64: 128, 128>}, {pipeline_mode = #tpu.pipeline_mode<synchronous>, transform_indices = @transform_4, window_bounds = array<i64: 1, 128>}, {transform_indices = @transform_5, window_bounds = array<i64: 8, 128>}]} {
    %c0 = arith.constant 0 : index
    %c0_0 = arith.constant 0 : index
    %0 = vector.load %arg1[%c0, %c0_0] : memref<8x32xbf16, #tpu.memory_space<vmem>>, vector<8x32xbf16>
    %c0_1 = arith.constant 0 : index
    %c0_2 = arith.constant 0 : index
    %1 = vector.load %arg2[%c0_1, %c0_2] : memref<32x128xbf16, #tpu.memory_space<vmem>>, vector<32x128xbf16>
    %cst = arith.constant dense<0.000000e+00> : vector<8x128xf32>
    %2 = tpu.matmul %0, %1, %cst {dimension_numbers = #tpu.dot_dimension_numbers<[1], [0], [0], [1], [0, 0, 1, 1], [], []>} : vector<8x32xbf16>, vector<32x128xbf16>, vector<8x128xf32> -> vector<8x128xf32>
    %c0_3 = arith.constant 0 : index
    %c0_4 = arith.constant 0 : index
    %3 = vector.load %arg3[%c0_3, %c0_4] : memref<1x128xf32, #tpu.memory_space<vmem>>, vector<1x128xf32>
    %4 = vector.broadcast %3 : vector<1x128xf32> to vector<8x128xf32>
    %5 = arith.addf %2, %4 : vector<8x128xf32>
    %6 = math.tanh %5 : vector<8x128xf32>
    %7 = arith.truncf %6 : vector<8x128xf32> to vector<8x128xbf16>
    %c0_5 = arith.constant 0 : index
    %c0_6 = arith.constant 0 : index
    %8 = vector.load %arg4[%c0_5, %c0_6] : memref<128x128xbf16, #tpu.memory_space<vmem>>, vector<128x128xbf16>
    %cst_7 = arith.constant dense<0.000000e+00> : vector<8x128xf32>
    %9 = tpu.matmul %7, %8, %cst_7 {dimension_numbers = #tpu.dot_dimension_numbers<[1], [0], [0], [1], [0, 0, 1, 1], [], []>} : vector<8x128xbf16>, vector<128x128xbf16>, vector<8x128xf32> -> vector<8x128xf32>
    %c0_8 = arith.constant 0 : index
    %c0_9 = arith.constant 0 : index
    %10 = vector.load %arg5[%c0_8, %c0_9] : memref<1x128xf32, #tpu.memory_space<vmem>>, vector<1x128xf32>
    %11 = vector.broadcast %10 : vector<1x128xf32> to vector<8x128xf32>
    %12 = arith.addf %9, %11 : vector<8x128xf32>
    %c0_10 = arith.constant 0 : index
    %c0_11 = arith.constant 0 : index
    %13 = vector.load %arg6[%c0_10, %c0_11] : memref<8x128xf32, #tpu.memory_space<vmem>>, vector<8x128xf32>
    tpu.vector_store %arg6[%c0_10, %c0_11], %12 {strides = array<i32>} : memref<8x128xf32, #tpu.memory_space<vmem>>, vector<8x128xf32>,
    return
  }
  func.func @transform_0(%arg0: i32) -> (i32, i32) {
    %c0_i32 = arith.constant 0 : i32
    %c0_i32_0 = arith.constant 0 : i32
    return %arg0, %c0_i32 : i32, i32
  }
  func.func @transform_1(%arg0: i32) -> (i32, i32) {
    %c0_i32 = arith.constant 0 : i32
    %c0_i32_0 = arith.constant 0 : i32
    %c0_i32_1 = arith.constant 0 : i32
    return %c0_i32, %c0_i32_0 : i32, i32
  }
  func.func @transform_2(%arg0: i32) -> (i32, i32) {
    %c0_i32 = arith.constant 0 : i32
    %c0_i32_0 = arith.constant 0 : i32
    %c0_i32_1 = arith.constant 0 : i32
    return %c0_i32, %c0_i32_0 : i32, i32
  }
  func.func @transform_3(%arg0: i32) -> (i32, i32) {
    %c0_i32 = arith.constant 0 : i32
    %c0_i32_0 = arith.constant 0 : i32
    %c0_i32_1 = arith.constant 0 : i32
    return %c0_i32, %c0_i32_0 : i32, i32
  }
  func.func @transform_4(%arg0: i32) -> (i32, i32) {
    %c0_i32 = arith.constant 0 : i32
    %c0_i32_0 = arith.constant 0 : i32
    %c0_i32_1 = arith.constant 0 : i32
    return %c0_i32, %c0_i32_0 : i32, i32
  }
  func.func @transform_5(%arg0: i32) -> (i32, i32) {
    %c0_i32 = arith.constant 0 : i32
    %c0_i32_0 = arith.constant 0 : i32
    return %arg0, %c0_i32 : i32, i32
  }
}

</mosaic_0001>

<llo_original>
// kernel: mlp_forward.1
$region0: #{mlp_forward.1}
  #allocation0 [shape = 'u32[]', space=smem, size = 0x4, offset = 0x4, fixed_abs, tag = 'smem constant byte address 0x4 - core index']
  #allocation1 [shape = 'u32[144,128]{1,0:T(1,128)}', space=vmem, size = 0x12000, scoped, tag = 'internal scratch']
  %s0 = inlined_call_operand.vmem [shape: bf16[8,32], index: 0, kind: input, shape index: {}]
  %s1 = inlined_call_operand.hbm [shape: bf16[32,128], index: 1, kind: input, shape index: {}]
  %s2 = inlined_call_operand.vmem [shape: f32[1,128], index: 2, kind: input, shape index: {}]
  %s3 = inlined_call_operand.hbm [shape: bf16[128,128], index: 3, kind: input, shape index: {}]
  %s4 = inlined_call_operand.vmem [shape: f32[1,128], index: 4, kind: input, shape index: {}]
  %s5 = inlined_call_operand.hbm [shape: f32[8,128], index: 5, kind: output, shape index: {}]
  %s6 = sld [smem:[#allocation0]]
  $region38: #{mlp_forward.1} parent=0
    _
  %s8 = ssub.s32 1, %s6
  %s9 = scalar_select 0, %s8, %s6
  $region1: #{mlp_forward.1} parent=0
    #allocation2 [shape = 'u8[8192]{0}', space=vmem, size = 0x2000, scoped, tag = 'input window, operand 1, single buffered']
    #allocation3 [shape = 's32[1]{0}', space=sflag, size = 0x4, scoped, tag = 'scoped memory for mlp_forward.1']
    #allocation4 [shape = 's32[1]{0}', space=sflag, size = 0x4, scoped, tag = 'scoped memory for mlp_forward.1']
    #allocation5 [shape = 'u8[32768]{0}', space=vmem, size = 0x8000, scoped, tag = 'input window, operand 3, single buffered']
    #allocation6 [shape = 's32[1]{0}', space=sflag, size = 0x4, scoped, tag = 'scoped memory for mlp_forward.1']
    #allocation7 [shape = 'u8[4096]{0}', space=vmem, size = 0x1000, scoped, tag = 'output window, operand 0, single buffered']
    %10 = vsyncpa [#allocation3], 0
    %11 = vsyncpa [#allocation6], 0
    %12 = vsyncpa [#allocation4], 0
    // Predicated region
    $region2: #{mlp_forward.1} parent=1 // pred_check
      _
    $region3: #{mlp_forward.1} parent=1 // pred_check_branch
      %14 = sbr.rel (0) target = $region5
    $region4: #{mlp_forward.1} parent=1 // pred_region
      _
    $region5: #{mlp_forward.1} parent=1 // pred_fallthru
      _
    // Predicated region
    $region6: #{mlp_forward.1} parent=1 // pred_check
      _
    $region7: #{mlp_forward.1} parent=1 // pred_check_branch
      %16 = sbr.rel (0) target = $region9
    $region8: #{mlp_forward.1} parent=1 // pred_region
      %s18 = ssub.s32 256, 256
      %19 = vsyncadd [#allocation3], %s18
      %s20 = sshll.u32 [#allocation2], 4
      %s21 = int_to_ptr.vmem [resolvable:$true] %s20
      %26 = dma.hbm_to_vmem [thread:$0]  %s1, 256, %s21, [#allocation3], 64, 64, 4
    $region9: #{mlp_forward.1} parent=1 // pred_fallthru
      _
    // Predicated region
    $region10: #{mlp_forward.1} parent=1 // pred_check
      _
    $region11: #{mlp_forward.1} parent=1 // pred_check_branch
      %28 = sbr.rel (0) target = $region13
    $region12: #{mlp_forward.1} parent=1 // pred_region
      _
    $region13: #{mlp_forward.1} parent=1 // pred_fallthru
      _
    // Predicated region
    $region14: #{mlp_forward.1} parent=1 // pred_check
      _
    $region15: #{mlp_forward.1} parent=1 // pred_check_branch
      %30 = sbr.rel (0) target = $region17
    $region16: #{mlp_forward.1} parent=1 // pred_region
      %s32 = ssub.s32 1024, 1024
      %33 = vsyncadd [#allocation6], %s32
      %s34 = sshll.u32 [#allocation5], 4
      %s35 = int_to_ptr.vmem [resolvable:$true] %s34
      %40 = dma.hbm_to_vmem [thread:$0]  %s3, 1024, %s35, [#allocation6], 64, 64, 4
    $region17: #{mlp_forward.1} parent=1 // pred_fallthru
      _
    // Predicated region
    $region18: #{mlp_forward.1} parent=1 // pred_check
      _
    $region19: #{mlp_forward.1} parent=1 // pred_check_branch
      %42 = sbr.rel (0) target = $region21
    $region20: #{mlp_forward.1} parent=1 // pred_region
      _
    $region21: #{mlp_forward.1} parent=1 // pred_fallthru
      _
    // Predicated region
    $region22: #{mlp_forward.1} parent=1 // pred_check
      _
    $region23: #{mlp_forward.1} parent=1 // pred_check_branch
      %44 = sbr.rel (0) target = $region25
    $region24: #{mlp_forward.1} parent=1 // pred_region
      %45 = dma.done [#allocation3], 256
    $region25: #{mlp_forward.1} parent=1 // pred_fallthru
      _
    // Predicated region
    $region26: #{mlp_forward.1} parent=1 // pred_check
      _
    $region27: #{mlp_forward.1} parent=1 // pred_check_branch
      %47 = sbr.rel (0) target = $region29
    $region28: #{mlp_forward.1} parent=1 // pred_region
      %48 = dma.done [#allocation6], 1024
    $region29: #{mlp_forward.1} parent=1 // pred_fallthru
      _
    %v50 = vld [vmem:[%s0] sm:$0xf]
    %v51 = vld [vmem:[#allocation2] sm:$0xf]
    %v52 = vld [vmem:[#allocation2 + $0x4] sm:$0xf]
    %v53 = vld [vmem:[#allocation2 + $0x8] sm:$0xf]
    %v54 = vld [vmem:[#allocation2 + $0xc] sm:$0xf]
    %v55 = vld [vmem:[%s2] sm:$0x1]
    %v57 = vlaneseq
    %v58 = vshrl.u32 %v57, 7
    %v59 = vsub.s32 0, %v58
    %v60 = vrot.slane %v55, %v59
    %v66 = vunpack.c.l.b16 %v51
    %v67 = vunpack.c.l.b16 %v52
    %v68 = vunpack.c.l.b16 %v53
    %v69 = vunpack.c.l.b16 %v54
    %v70 = vpack.c.b16 %v67, %v66
    %v71 = vpack.c.b16 %v69, %v68
    %vm74 = vcmask 261120
    %v76 = vsel %vm74, %v50, 0
    %78 = vmatprep.subr.bf16.mxu0 0
    %79 = vmatpush1.bf16.msra.mxu0 %v70
    %80 = vmatprep.subr.bf16.mxu0 0
    %81 = vmatpush1.bf16.msra.mxu0 %v71
    %82 = vmatprep.subr.bf16.mxu0 0
    %83 = vmatpush1.bf16.msra.mxu0 0
    %84 = vmatprep.subr.bf16.mxu0 0
    %85 = vmatpush1.bf16.msra.mxu0 0
    %86 = vmatprep.subr.bf16.mxu0 0
    %87 = vmatpush1.bf16.msra.mxu0 0
    %88 = vmatprep.subr.bf16.mxu0 0
    %89 = vmatpush1.bf16.msra.mxu0 0
    %90 = vmatprep.subr.bf16.mxu0 0
    %91 = vmatpush1.bf16.msra.mxu0 0
    %92 = vmatprep.subr.bf16.mxu0 0
    %93 = vmatpush1.bf16.msra.mxu0 0
    %94 = vmatprep.subr.bf16.mxu0 0
    %95 = vmatpush1.bf16.msra.mxu0 0
    %96 = vmatprep.subr.bf16.mxu0 0
    %97 = vmatpush1.bf16.msra.mxu0 0
    %98 = vmatprep.subr.bf16.mxu0 0
    %99 = vmatpush1.bf16.msra.mxu0 0
    %100 = vmatprep.subr.bf16.mxu0 0
    %101 = vmatpush1.bf16.msra.mxu0 0
    %102 = vmatprep.subr.bf16.mxu0 0
    %103 = vmatpush1.bf16.msra.mxu0 0
    %104 = vmatprep.subr.bf16.mxu0 0
    %105 = vmatpush1.bf16.msra.mxu0 0
    %106 = vmatprep.subr.bf16.mxu0 0
    %107 = vmatpush1.bf16.msra.mxu0 0
    %108 = vmatprep.subr.bf16.mxu0 0
    %109 = vmatpush1.bf16.msra.mxu0 0
    %110 = vmatprep.mubr.bf16.mxu0 0
    %111 = vmatmul.mubr.bf16.gmra.mrb[0].mxu0 %v76
    %v112 = vpop.f32.mrb[0].mxu0
    %v113 = vadd.f32 %v60, %v112
    %v114 = vpop.f32.mrb[0].mxu0
    %v115 = vpop.f32.mrb[0].mxu0
    %v116 = vpop.f32.mrb[0].mxu0
    %117 = vdwg.mxu0
    %v118 = vtanh.pop %v113
    %v119 = vpack.c.bf16 %v118, %v118
    %v120 = vld [vmem:[#allocation5] sm:$0xf]
    %v121 = vld [vmem:[#allocation5 + $0x4] sm:$0xf]
    %v122 = vld [vmem:[#allocation5 + $0x8] sm:$0xf]
    %v123 = vld [vmem:[#allocation5 + $0xc] sm:$0xf]
    %v124 = vld [vmem:[#allocation5 + $0x10] sm:$0xf]
    %v125 = vld [vmem:[#allocation5 + $0x14] sm:$0xf]
    %v126 = vld [vmem:[#allocation5 + $0x18] sm:$0xf]
    %v127 = vld [vmem:[#allocation5 + $0x1c] sm:$0xf]
    %v128 = vld [vmem:[#allocation5 + $0x20] sm:$0xf]
    %v129 = vld [vmem:[#allocation5 + $0x24] sm:$0xf]
    %v130 = vld [vmem:[#allocation5 + $0x28] sm:$0xf]
    %v131 = vld [vmem:[#allocation5 + $0x2c] sm:$0xf]
    %v132 = vld [vmem:[#allocation5 + $0x30] sm:$0xf]
    %v133 = vld [vmem:[#allocation5 + $0x34] sm:$0xf]
    %v134 = vld [vmem:[#allocation5 + $0x38] sm:$0xf]
    %v135 = vld [vmem:[#allocation5 + $0x3c] sm:$0xf]
    %v136 = vld [vmem:[%s4] sm:$0x1]
    %v138 = vlaneseq
    %v139 = vshrl.u32 %v138, 7
    %v140 = vsub.s32 0, %v139
    %v141 = vrot.slane %v136, %v140
    %v159 = vunpack.c.l.b16 %v120
    %v160 = vunpack.c.l.b16 %v121
    %v161 = vunpack.c.l.b16 %v122
    %v162 = vunpack.c.l.b16 %v123
    %v163 = vunpack.c.l.b16 %v124
    %v164 = vunpack.c.l.b16 %v125
    %v165 = vunpack.c.l.b16 %v126
    %v166 = vunpack.c.l.b16 %v127
    %v167 = vunpack.c.l.b16 %v128
    %v168 = vunpack.c.l.b16 %v129
    %v169 = vunpack.c.l.b16 %v130
    %v170 = vunpack.c.l.b16 %v131
    %v171 = vunpack.c.l.b16 %v132
    %v172 = vunpack.c.l.b16 %v133
    %v173 = vunpack.c.l.b16 %v134
    %v174 = vunpack.c.l.b16 %v135
    %v175 = vpack.c.b16 %v160, %v159
    %v176 = vpack.c.b16 %v162, %v161
    %v177 = vpack.c.b16 %v164, %v163
    %v178 = vpack.c.b16 %v166, %v165
    %v179 = vpack.c.b16 %v168, %v167
    %v180 = vpack.c.b16 %v170, %v169
    %v181 = vpack.c.b16 %v172, %v171
    %v182 = vpack.c.b16 %v174, %v173
    %191 = vmatprep.subr.bf16.mxu0 0
    %192 = vmatpush1.bf16.msra.mxu0 %v175
    %193 = vmatprep.subr.bf16.mxu0 0
    %194 = vmatpush1.bf16.msra.mxu0 %v176
    %195 = vmatprep.subr.bf16.mxu0 0
    %196 = vmatpush1.bf16.msra.mxu0 %v177
    %197 = vmatprep.subr.bf16.mxu0 0
    %198 = vmatpush1.bf16.msra.mxu0 %v178
    %199 = vmatprep.subr.bf16.mxu0 0
    %200 = vmatpush1.bf16.msra.mxu0 %v179
    %201 = vmatprep.subr.bf16.mxu0 0
    %202 = vmatpush1.bf16.msra.mxu0 %v180
    %203 = vmatprep.subr.bf16.mxu0 0
    %204 = vmatpush1.bf16.msra.mxu0 %v181
    %205 = vmatprep.subr.bf16.mxu0 0
    %206 = vmatpush1.bf16.msra.mxu0 %v182
    %207 = vmatprep.subr.bf16.mxu0 0
    %208 = vmatpush1.bf16.msra.mxu0 0
    %209 = vmatprep.subr.bf16.mxu0 0
    %210 = vmatpush1.bf16.msra.mxu0 0
    %211 = vmatprep.subr.bf16.mxu0 0
    %212 = vmatpush1.bf16.msra.mxu0 0
    %213 = vmatprep.subr.bf16.mxu0 0
    %214 = vmatpush1.bf16.msra.mxu0 0
    %215 = vmatprep.subr.bf16.mxu0 0
    %216 = vmatpush1.bf16.msra.mxu0 0
    %217 = vmatprep.subr.bf16.mxu0 0
    %218 = vmatpush1.bf16.msra.mxu0 0
    %219 = vmatprep.subr.bf16.mxu0 0
    %220 = vmatpush1.bf16.msra.mxu0 0
    %221 = vmatprep.subr.bf16.mxu0 0
    %222 = vmatpush1.bf16.msra.mxu0 0
    %223 = vmatprep.mubr.bf16.mxu0 0
    %224 = vmatmul.mubr.bf16.gmra.mrb[0].mxu0 %v119
    %v225 = vpop.f32.mrb[0].mxu0
    %v226 = vadd.f32 %v141, %v225
    %v227 = vpop.f32.mrb[0].mxu0
    %v228 = vpop.f32.mrb[0].mxu0
    %v229 = vpop.f32.mrb[0].mxu0
    %230 = vdwg.mxu0
    %231 = vst [vmem:[#allocation7] sm:$0xff] %v226
    // Predicated region
    $region30: #{mlp_forward.1} parent=1 // pred_check
      _
    $region31: #{mlp_forward.1} parent=1 // pred_check_branch
      %233 = sbr.rel (0) target = $region33
    $region32: #{mlp_forward.1} parent=1 // pred_region
      %s235 = ssub.s32 128, 128
      %236 = vsyncadd [#allocation4], %s235
      %s238 = sshll.u32 [#allocation7], 4
      %s239 = int_to_ptr.vmem [resolvable:$true] %s238
      %241 = dma.vmem_to_hbm [thread:$0]  %s239, 128, %s5, [#allocation4]
    $region33: #{mlp_forward.1} parent=1 // pred_fallthru
      _
    // Predicated region
    $region34: #{mlp_forward.1} parent=1 // pred_check
      _
    $region35: #{mlp_forward.1} parent=1 // pred_check_branch
      %243 = sbr.rel (0) target = $region37
    $region36: #{mlp_forward.1} parent=1 // pred_region
      %244 = dma.done [#allocation4], 128
    $region37: #{mlp_forward.1} parent=1 // pred_fallthru
      _
    %245 = vsyncpa [#allocation3], 1
    %246 = vsyncpa [#allocation6], 1
    %247 = vsyncpa [#allocation4], 1

</llo_original>
